<compile_context>
chip_gen: v7x
topology: tpu7x:2x2x1
jax: 0.10.0
libtpu: 0.0.40
codegen_flags: <defaults>
</compile_context>

<pallas_src>
import functools

import jax
import jax.numpy as jnp
from jax.experimental import pallas as pl
from jax.experimental.pallas import tpu as pltpu


# --------------------------------------------------------------------------- kernels

def _pe_add_kernel(x_ref, pe_ref, o_ref):
    # x_ref/o_ref: (B_TILE, FLAT_TILE); pe_ref: (1, FLAT_TILE) broadcast over sublanes.
    o_ref[...] = (x_ref[...].astype(jnp.float32)
                  + pe_ref[...].astype(jnp.float32)).astype(o_ref.dtype)


def _pe_add_dropout_kernel(x_ref, pe_ref, bits_ref, o_ref, *, keep_threshold, inv_keep):
    y = x_ref[...].astype(jnp.float32) + pe_ref[...].astype(jnp.float32)
    # Integer-domain dropout test: keep iff low-23 random bits >= p * 2^23.
    keep = (bits_ref[...] & jnp.int32(0x7FFFFF)) >= jnp.int32(keep_threshold)
    o_ref[...] = jnp.where(keep, y * jnp.float32(inv_keep),
                           jnp.float32(0.0)).astype(o_ref.dtype)


# --------------------------------------------------------------------------- helpers

def make_positional_encoding_table(max_len, d_model, dtype=jnp.float32):
    """Same buffer as the PyTorch __init__ (shape (max_len, d_model)); d_model even."""
    assert d_model % 2 == 0, "d_model must be even (as in the PyTorch module)"
    position = jnp.arange(max_len, dtype=jnp.float32)[:, None]                       # (L, 1)
    div_term = 1.0 / (10000.0 ** (jnp.arange(0, d_model, 2, dtype=jnp.float32) / d_model))
    angles = position * div_term                                                     # (L, d/2)
    pe = jnp.zeros((max_len, d_model), jnp.float32)
    pe = pe.at[:, 0::2].set(jnp.sin(angles))
    pe = pe.at[:, 1::2].set(jnp.cos(angles))
    return pe.astype(dtype)


def _dropout_bits(key, b, flat):
    """Deterministic per-element random bits (int32) for the dropout mask."""
    bits_u32 = jax.random.bits(key, (b, flat), jnp.uint32)
    return jax.lax.bitcast_convert_type(bits_u32, jnp.int32)


def _pick_tile(total, align, max_tile):
    """Largest tile <= max_tile that is a multiple of `align` and divides `total`;
    falls back to the full dim (always legal w.r.t. the (8,128) block rule)."""
    if total <= max_tile:
        return total
    if total % align != 0:
        return total
    t = (max_tile // align) * align
    while t >= align:
        if total % t == 0:
            return t
        t -= align
    return total


# --------------------------------------------------------------------------- forward

def positional_encoding_forward(x, pe_table, *, dropout_p=0.0, training=False, rng_key=None):
    """x: (batch, seq, d_model); pe_table: (max_len, d_model) from make_positional_encoding_table."""
    b, s, d = x.shape
    assert pe_table.shape[1] == d and pe_table.shape[0] >= s
    flat = s * d

    # Lane-dense layout: (seq, d_model) flattened onto the lane axis.
    x_flat = x.reshape(b, flat)
    pe_flat = pe_table[:s].reshape(1, flat).astype(x.dtype)

    # Tiling: sublane-dense batch tiles (multiple of 8 or full), 128-aligned flat tiles,
    # ~2 MiB of x per grid step.
    itemsize = jnp.dtype(x.dtype).itemsize
    b_tile = _pick_tile(b, 8, 64)
    max_flat_tile = max(128, (2 << 20) // (itemsize * b_tile))
    flat_tile = _pick_tile(flat, 128, max_flat_tile)
    grid = (b // b_tile, flat // flat_tile)

    x_spec = pl.BlockSpec((b_tile, flat_tile), lambda i, j: (i, j))
    pe_spec = pl.BlockSpec((1, flat_tile), lambda i, j: (0, j))
    out_spec = pl.BlockSpec((b_tile, flat_tile), lambda i, j: (i, j))
    cparams = pltpu.CompilerParams(
        dimension_semantics=("parallel", "parallel"),
        vmem_limit_bytes=32 * 1024 * 1024,
    )
    out_shape = jax.ShapeDtypeStruct((b, flat), x.dtype)

    use_dropout = bool(training) and float(dropout_p) > 0.0
    if not use_dropout:
        out_flat = pl.pallas_call(
            _pe_add_kernel,
            out_shape=out_shape,
            grid=grid,
            in_specs=[x_spec, pe_spec],
            out_specs=out_spec,
            compiler_params=cparams,
        )(x_flat, pe_flat)
    else:
        if rng_key is None:
            rng_key = jax.random.PRNGKey(0)
        bits = _dropout_bits(rng_key, b, flat)
        keep_threshold = int(round(float(dropout_p) * (1 << 23)))
        kernel = functools.partial(
            _pe_add_dropout_kernel,
            keep_threshold=keep_threshold,
            inv_keep=1.0 / (1.0 - float(dropout_p)),
        )
        out_flat = pl.pallas_call(
            kernel,
            out_shape=out_shape,
            grid=grid,
            in_specs=[x_spec, pe_spec, x_spec],   # bits uses the same block layout as x
            out_specs=out_spec,
            compiler_params=cparams,
        )(x_flat, pe_flat, bits)

    return out_flat.reshape(b, s, d)


# --------------------------------------------------------------------------- demo / test

def _reference(x, pe_table):
    """Pure-JAX transcription of the PyTorch forward with dropout disabled."""
    return x + pe_table[None, :x.shape[1], :]


if __name__ == "__main__":
    batch, seq, d_model, max_len = 2, 8, 32, 64
    dropout_p = 0.1

    key = jax.random.PRNGKey(0)
    kx, kdrop = jax.random.split(key)
    x = jax.random.normal(kx, (batch, seq, d_model), dtype=jnp.float32)
    pe_table = make_positional_encoding_table(max_len, d_model)
    ref = _reference(x, pe_table)

    # Eval path (dropout is identity): must match the reference.
    out_eval = positional_encoding_forward(x, pe_table, dropout_p=dropout_p, training=False)
    jax.block_until_ready(out_eval)
    assert jnp.allclose(out_eval, ref, atol=1e-6), "eval-mode mismatch"

    # Training path: recompute the exact same mask from the same bits and compare.
    out_train = positional_encoding_forward(
        x, pe_table, dropout_p=dropout_p, training=True, rng_key=kdrop)
    jax.block_until_ready(out_train)

    bits = _dropout_bits(kdrop, batch, seq * d_model)
    thr = int(round(dropout_p * (1 << 23)))
    keep = ((bits & jnp.int32(0x7FFFFF)) >= jnp.int32(thr)).reshape(batch, seq, d_model)
    ref_train = jnp.where(keep, ref * jnp.float32(1.0 / (1.0 - dropout_p)), 0.0)
    assert jnp.allclose(out_train, ref_train, atol=1e-5), "training-mode mismatch"

    frac_dropped = 1.0 - jnp.mean(keep.astype(jnp.float32))
    assert frac_dropped < 0.6, f"implausible dropout fraction {frac_dropped}"

    print("KERNEL_OK")
</pallas_src>

<mosaic_0001>
module attributes {stable_mosaic.version = 11 : i64} {
  func.func @_pe_add_kernel(%arg0: i32, %arg1: i32, %arg2: memref<2x256xf32, #tpu.memory_space<vmem>>, %arg3: memref<1x256xf32, #tpu.memory_space<vmem>>, %arg4: memref<2x256xf32, #tpu.memory_space<vmem>>) attributes {dimension_semantics = [#tpu.dimension_semantics<parallel>, #tpu.dimension_semantics<parallel>], iteration_bounds = array<i64: 1, 1>, scalar_prefetch = 0 : i64, scratch_operands = 0 : i64, tpu.core_type = #tpu.core_type<tc>, window_params = [{transform_indices = @transform_0, window_bounds = array<i64: 2, 256>}, {transform_indices = @transform_1, window_bounds = array<i64: 1, 256>}, {transform_indices = @transform_2, window_bounds = array<i64: 2, 256>}]} {
    %c0 = arith.constant 0 : index
    %c0_0 = arith.constant 0 : index
    %0 = vector.load %arg2[%c0, %c0_0] : memref<2x256xf32, #tpu.memory_space<vmem>>, vector<2x256xf32>
    %c0_1 = arith.constant 0 : index
    %c0_2 = arith.constant 0 : index
    %1 = vector.load %arg3[%c0_1, %c0_2] : memref<1x256xf32, #tpu.memory_space<vmem>>, vector<1x256xf32>
    %2 = vector.broadcast %1 : vector<1x256xf32> to vector<2x256xf32>
    %3 = arith.addf %0, %2 : vector<2x256xf32>
    %c0_3 = arith.constant 0 : index
    %c0_4 = arith.constant 0 : index
    %4 = vector.load %arg4[%c0_3, %c0_4] : memref<2x256xf32, #tpu.memory_space<vmem>>, vector<2x256xf32>
    tpu.vector_store %arg4[%c0_3, %c0_4], %3 {strides = array<i32>} : memref<2x256xf32, #tpu.memory_space<vmem>>, vector<2x256xf32>,
    return
  }
  func.func @transform_0(%arg0: i32, %arg1: i32) -> (i32, i32) {
    %c0_i32 = arith.constant 0 : i32
    return %arg0, %arg1 : i32, i32
  }
  func.func @transform_1(%arg0: i32, %arg1: i32) -> (i32, i32) {
    %c0_i32 = arith.constant 0 : i32
    %c0_i32_0 = arith.constant 0 : i32
    return %c0_i32, %arg1 : i32, i32
  }
  func.func @transform_2(%arg0: i32, %arg1: i32) -> (i32, i32) {
    %c0_i32 = arith.constant 0 : i32
    return %arg0, %arg1 : i32, i32
  }
}

</mosaic_0001>

<llo_original>
// kernel: tpu_custom_call.1
$region0: #{tpu_custom_call.1}
  #allocation0 [shape = 'u32[]', space=smem, size = 0x4, offset = 0x4, fixed_abs, tag = 'smem constant byte address 0x4 - core index']
  #allocation1 [shape = 'u32[144,128]{1,0:T(1,128)}', space=vmem, size = 0x12000, scoped, tag = 'internal scratch']
  %s0 = inlined_call_operand.hbm [shape: f32[2,256], index: 0, kind: input, shape index: {}]
  %s1 = inlined_call_operand.vmem [shape: f32[1,256], index: 1, kind: input, shape index: {}]
  %s2 = inlined_call_operand.hbm [shape: f32[2,256], index: 2, kind: output, shape index: {}]
  %s3 = sld [smem:[#allocation0]]
  $region22: #{tpu_custom_call.1} parent=0
    _
  %s5 = ssub.s32 1, %s3
  %s6 = scalar_select 0, %s5, %s3
  $region1: #{tpu_custom_call.1} parent=0
    #allocation2 [shape = 'u8[2048]{0}', space=vmem, size = 0x800, scoped, tag = 'input window, operand 0, single buffered']
    #allocation3 [shape = 's32[1]{0}', space=sflag, size = 0x4, scoped, tag = 'scoped memory for tpu_custom_call.1']
    #allocation4 [shape = 's32[1]{0}', space=sflag, size = 0x4, scoped, tag = 'scoped memory for tpu_custom_call.1']
    #allocation5 [shape = 'u8[2048]{0}', space=vmem, size = 0x800, scoped, tag = 'output window, operand 0, single buffered']
    %7 = vsyncpa [#allocation3], 0
    %8 = vsyncpa [#allocation4], 0
    // Predicated region
    $region2: #{tpu_custom_call.1} parent=1 // pred_check
      _
    $region3: #{tpu_custom_call.1} parent=1 // pred_check_branch
      %10 = sbr.rel (0) target = $region5
    $region4: #{tpu_custom_call.1} parent=1 // pred_region
      %s12 = ssub.s32 64, 64
      %13 = vsyncadd [#allocation3], %s12
      %s15 = sshll.u32 [#allocation2], 4
      %s16 = int_to_ptr.vmem [resolvable:$true] %s15
      %18 = dma.hbm_to_vmem [thread:$0]  %s0, 64, %s16, [#allocation3]
    $region5: #{tpu_custom_call.1} parent=1 // pred_fallthru
      _
    // Predicated region
    $region6: #{tpu_custom_call.1} parent=1 // pred_check
      _
    $region7: #{tpu_custom_call.1} parent=1 // pred_check_branch
      %20 = sbr.rel (0) target = $region9
    $region8: #{tpu_custom_call.1} parent=1 // pred_region
      _
    $region9: #{tpu_custom_call.1} parent=1 // pred_fallthru
      _
    // Predicated region
    $region10: #{tpu_custom_call.1} parent=1 // pred_check
      _
    $region11: #{tpu_custom_call.1} parent=1 // pred_check_branch
      %22 = sbr.rel (0) target = $region13
    $region12: #{tpu_custom_call.1} parent=1 // pred_region
      %23 = dma.done [#allocation3], 64
    $region13: #{tpu_custom_call.1} parent=1 // pred_fallthru
      _
    %v24 = vld [vmem:[#allocation2] sm:$0xf]
    %v25 = vld [vmem:[%s1] sm:$0x3]
    %v27 = vlaneseq
    %v28 = vshrl.u32 %v27, 7
    %v29 = vsub.s32 0, %v28
    %v30 = vrot.slane %v25, %v29
    %v31 = vlaneseq
    %v32 = vshrl.u32 %v31, 7
    %v33 = vsub.s32 1, %v32
    %v34 = vrot.slane %v25, %v33
    %v35 = vcombine.low %v30, %v34
    %v37 = vunpack.c.l.s4 1983009808
    %v38 = vunpack.c.0.s8 %v37
    %v39 = vlaneseq
    %v40 = vshrl.u32 %v39, 7
    %v41 = vsub.s32 %v38, %v40
    %v42 = vrot.slane %v35, %v41
    %v44 = vadd.f32 %v24, %v42
    %45 = vst [vmem:[#allocation5] sm:$0xf] %v44
    // Predicated region
    $region14: #{tpu_custom_call.1} parent=1 // pred_check
      _
    $region15: #{tpu_custom_call.1} parent=1 // pred_check_branch
      %47 = sbr.rel (0) target = $region17
    $region16: #{tpu_custom_call.1} parent=1 // pred_region
      %s49 = ssub.s32 64, 64
      %50 = vsyncadd [#allocation4], %s49
      %s52 = sshll.u32 [#allocation5], 4
      %s53 = int_to_ptr.vmem [resolvable:$true] %s52
      %55 = dma.vmem_to_hbm [thread:$0]  %s53, 64, %s2, [#allocation4]
    $region17: #{tpu_custom_call.1} parent=1 // pred_fallthru
      _
    // Predicated region
    $region18: #{tpu_custom_call.1} parent=1 // pred_check
      _
    $region19: #{tpu_custom_call.1} parent=1 // pred_check_branch
      %57 = sbr.rel (0) target = $region21
    $region20: #{tpu_custom_call.1} parent=1 // pred_region
      %58 = dma.done [#allocation4], 64
    $region21: #{tpu_custom_call.1} parent=1 // pred_fallthru
      _
    %59 = vsyncpa [#allocation3], 1
    %60 = vsyncpa [#allocation4], 1

</llo_original>
